<compile_context>
chip_gen: v7x
topology: tpu7x:2x2x1
jax: 0.10.0
libtpu: 0.0.40
codegen_flags: <defaults>
</compile_context>

<pallas_src>
import math

import jax
import jax.numpy as jnp
from jax.experimental import pallas as pl
from jax.experimental.pallas import tpu as pltpu


def drop_path_kernel(x_ref, scale_ref, o_ref):
    # x_ref: (tr, tc)   scale_ref: (tr, 1) f32   o_ref: (tr, tc)
    # Per-sample scale broadcasts across the lane (feature) axis.  Compute in f32
    # so low-precision inputs follow the reference's rounding order.
    o_ref[...] = (x_ref[...].astype(jnp.float32) * scale_ref[...]).astype(o_ref.dtype)


def drop_path_pallas(x, drop_prob=0.0, training=False, rng_key=None,
                     *, block_rows=None, block_cols=None, donate=False):
    """DropPath forward. x: (B, ...). Returns an array with the same shape/dtype."""
    # --- Identity short-circuit: no kernel, no extra HBM traffic. ---
    if drop_prob == 0.0 or not training:
        return x

    if rng_key is None:
        raise ValueError("rng_key must be provided when training=True and drop_prob > 0")

    orig_shape = x.shape
    B = x.shape[0]
    F = math.prod(x.shape[1:]) if x.ndim > 1 else 1
    x2d = x.reshape(B, F)

    # Per-sample scale = mask / keep_prob, kept in f32 (B scalars; host-side RNG).
    keep_prob = 1.0 - drop_prob
    u = jax.random.uniform(rng_key, (B, 1), dtype=jnp.float32)
    mask = jnp.floor(keep_prob + u)          # 0/1, P(1) = keep_prob (torch semantics)
    scale = mask * jnp.float32(1.0 / keep_prob)

    # --- Tile selection: lane-dense, no padding, ~2 MiB tiles. ---
    itemsize = jnp.dtype(x.dtype).itemsize
    sub = max(8, 32 // itemsize)             # dtype-native sublane multiple (8/16/32)

    if block_rows is None:
        block_rows = 256                     # multiple of 32 -> full-width for all dtypes
    block_rows = max(sub, (block_rows // sub) * sub)

    if block_cols is None:
        # Target ~2 MiB tiles; double-buffered x+out working set ~= 8 MiB (< 16 MiB
        # scoped VMEM on v5e, far under v6e/v7x limits).
        block_cols = max(128, ((2 * 1024 * 1024) // (block_rows * itemsize)) // 128 * 128)
    block_cols = max(128, (block_cols // 128) * 128)

    # tr / tc are either the full extent (always legal) or a multiple of (8, 128);
    # a partial boundary block is masked by Pallas, so no jnp.pad / slice is needed.
    tr = min(block_rows, B)
    tc = min(block_cols, F)

    grid = (pl.cdiv(B, tr), pl.cdiv(F, tc))

    out2d = pl.pallas_call(
        drop_path_kernel,
        out_shape=jax.ShapeDtypeStruct((B, F), x.dtype),
        grid=grid,
        in_specs=[
            pl.BlockSpec((tr, tc), lambda i, j: (i, j)),   # x tile
            pl.BlockSpec((tr, 1), lambda i, j: (i, 0)),    # per-sample scale; constant
                                                           # over j -> not re-DMA'd
        ],
        out_specs=pl.BlockSpec((tr, tc), lambda i, j: (i, j)),
        compiler_params=pltpu.CompilerParams(
            dimension_semantics=("parallel", "parallel"),  # lets v7x's 2 TCs split the grid
        ),
        input_output_aliases=({0: 0} if donate else {}),
    )(x2d, scale)

    return out2d.reshape(orig_shape)


def drop_path_reference(x, drop_prob=0.0, training=False, rng_key=None):
    """Pure-JAX reference mirroring the PyTorch drop_path exactly."""
    if drop_prob == 0.0 or not training:
        return x
    keep_prob = 1.0 - drop_prob
    u = jax.random.uniform(rng_key, (x.shape[0], 1), dtype=jnp.float32)
    random_tensor = jnp.floor(keep_prob + u)
    bshape = (x.shape[0],) + (1,) * (x.ndim - 1)
    random_tensor = random_tensor.reshape(bshape).astype(x.dtype)
    return (x / keep_prob) * random_tensor


if __name__ == "__main__":
    key = jax.random.PRNGKey(0)
    kx, kd = jax.random.split(key)

    # Small shapes consistent with the module: (B, C, H, W) feature map.
    B, C, H, W = 2, 4, 16, 16
    x = jax.random.normal(kx, (B, C, H, W), dtype=jnp.float32)

    # Eval-mode path: DropPath is the identity (short-circuited, no kernel launch).
    out_eval = drop_path_pallas(x, drop_prob=0.1, training=False)
    out_eval = jax.block_until_ready(out_eval)
    assert out_eval.shape == x.shape
    assert jnp.array_equal(out_eval, x), "eval-mode DropPath must be identity"

    # Training path: per-sample stochastic depth with 1/keep_prob rescaling (kernel runs).
    drop_prob = 0.5
    out_train = drop_path_pallas(x, drop_prob=drop_prob, training=True, rng_key=kd)
    out_train = jax.block_until_ready(out_train)
    ref_train = drop_path_reference(x, drop_prob=drop_prob, training=True, rng_key=kd)
    assert out_train.shape == x.shape
    assert jnp.allclose(out_train, ref_train, atol=1e-6, rtol=1e-6), "mismatch vs reference"

    print("KERNEL_OK")
</pallas_src>

<mosaic_0001>
module attributes {stable_mosaic.version = 11 : i64} {
  func.func @drop_path_kernel(%arg0: i32, %arg1: i32, %arg2: memref<2x1024xf32, #tpu.memory_space<vmem>>, %arg3: memref<2x1xf32, #tpu.memory_space<vmem>>, %arg4: memref<2x1024xf32, #tpu.memory_space<vmem>>) attributes {dimension_semantics = [#tpu.dimension_semantics<parallel>, #tpu.dimension_semantics<parallel>], iteration_bounds = array<i64: 1, 1>, scalar_prefetch = 0 : i64, scratch_operands = 0 : i64, tpu.core_type = #tpu.core_type<tc>, window_params = [{transform_indices = @transform_0, window_bounds = array<i64: 2, 1024>}, {transform_indices = @transform_1, window_bounds = array<i64: 2, 1>}, {transform_indices = @transform_2, window_bounds = array<i64: 2, 1024>}]} {
    %c0 = arith.constant 0 : index
    %c0_0 = arith.constant 0 : index
    %0 = vector.load %arg2[%c0, %c0_0] : memref<2x1024xf32, #tpu.memory_space<vmem>>, vector<2x1024xf32>
    %c0_1 = arith.constant 0 : index
    %c0_2 = arith.constant 0 : index
    %1 = vector.load %arg3[%c0_1, %c0_2] : memref<2x1xf32, #tpu.memory_space<vmem>>, vector<2x1xf32>
    %2 = vector.broadcast %1 : vector<2x1xf32> to vector<2x1024xf32>
    %3 = arith.mulf %0, %2 : vector<2x1024xf32>
    %c0_3 = arith.constant 0 : index
    %c0_4 = arith.constant 0 : index
    %4 = vector.load %arg4[%c0_3, %c0_4] : memref<2x1024xf32, #tpu.memory_space<vmem>>, vector<2x1024xf32>
    tpu.vector_store %arg4[%c0_3, %c0_4], %3 {strides = array<i32>} : memref<2x1024xf32, #tpu.memory_space<vmem>>, vector<2x1024xf32>,
    return
  }
  func.func @transform_0(%arg0: i32, %arg1: i32) -> (i32, i32) {
    %c0_i32 = arith.constant 0 : i32
    return %arg0, %arg1 : i32, i32
  }
  func.func @transform_1(%arg0: i32, %arg1: i32) -> (i32, i32) {
    %c0_i32 = arith.constant 0 : i32
    %c0_i32_0 = arith.constant 0 : i32
    return %arg0, %c0_i32 : i32, i32
  }
  func.func @transform_2(%arg0: i32, %arg1: i32) -> (i32, i32) {
    %c0_i32 = arith.constant 0 : i32
    return %arg0, %arg1 : i32, i32
  }
}

</mosaic_0001>

<llo_original>
// kernel: tpu_custom_call.1
$region0: #{tpu_custom_call.1}
  #allocation0 [shape = 'u32[]', space=smem, size = 0x4, offset = 0x4, fixed_abs, tag = 'smem constant byte address 0x4 - core index']
  #allocation1 [shape = 'u32[144,128]{1,0:T(1,128)}', space=vmem, size = 0x12000, scoped, tag = 'internal scratch']
  %s0 = inlined_call_operand.hbm [shape: f32[2,1024], index: 0, kind: input, shape index: {}]
  %s1 = inlined_call_operand.vmem [shape: f32[2,1], index: 1, kind: input, shape index: {}]
  %s2 = inlined_call_operand.hbm [shape: f32[2,1024], index: 2, kind: output, shape index: {}]
  %s3 = sld [smem:[#allocation0]]
  $region22: #{tpu_custom_call.1} parent=0
    _
  %s5 = ssub.s32 1, %s3
  %s6 = scalar_select 0, %s5, %s3
  $region1: #{tpu_custom_call.1} parent=0
    #allocation2 [shape = 'u8[8192]{0}', space=vmem, size = 0x2000, scoped, tag = 'input window, operand 0, single buffered']
    #allocation3 [shape = 's32[1]{0}', space=sflag, size = 0x4, scoped, tag = 'scoped memory for tpu_custom_call.1']
    #allocation4 [shape = 's32[1]{0}', space=sflag, size = 0x4, scoped, tag = 'scoped memory for tpu_custom_call.1']
    #allocation5 [shape = 'u8[8192]{0}', space=vmem, size = 0x2000, scoped, tag = 'output window, operand 0, single buffered']
    %7 = vsyncpa [#allocation3], 0
    %8 = vsyncpa [#allocation4], 0
    // Predicated region
    $region2: #{tpu_custom_call.1} parent=1 // pred_check
      _
    $region3: #{tpu_custom_call.1} parent=1 // pred_check_branch
      %10 = sbr.rel (0) target = $region5
    $region4: #{tpu_custom_call.1} parent=1 // pred_region
      %s12 = ssub.s32 256, 256
      %13 = vsyncadd [#allocation3], %s12
      %s15 = sshll.u32 [#allocation2], 4
      %s16 = int_to_ptr.vmem [resolvable:$true] %s15
      %18 = dma.hbm_to_vmem [thread:$0]  %s0, 256, %s16, [#allocation3]
    $region5: #{tpu_custom_call.1} parent=1 // pred_fallthru
      _
    // Predicated region
    $region6: #{tpu_custom_call.1} parent=1 // pred_check
      _
    $region7: #{tpu_custom_call.1} parent=1 // pred_check_branch
      %20 = sbr.rel (0) target = $region9
    $region8: #{tpu_custom_call.1} parent=1 // pred_region
      _
    $region9: #{tpu_custom_call.1} parent=1 // pred_fallthru
      _
    // Predicated region
    $region10: #{tpu_custom_call.1} parent=1 // pred_check
      _
    $region11: #{tpu_custom_call.1} parent=1 // pred_check_branch
      %22 = sbr.rel (0) target = $region13
    $region12: #{tpu_custom_call.1} parent=1 // pred_region
      %23 = dma.done [#allocation3], 256
    $region13: #{tpu_custom_call.1} parent=1 // pred_fallthru
      _
    %v24 = vld [vmem:[#allocation2] sm:$0xff]
    %v25 = vld [vmem:[#allocation2 + $0x8] sm:$0xff]
    %v26 = vld [vmem:[%s1] sm:$0x3]
    %28 = vset.pattern.permute.xlu0 0
    %29 = vperm.xlu0 %28, %v26
    %v30 = vpop.permute.xlu0 %29
    %v32 = vunpack.c.l.s4 269488144
    %v33 = vunpack.c.0.s8 %v32
    %v34 = vlaneseq
    %v35 = vshrl.u32 %v34, 7
    %v36 = vsub.s32 %v33, %v35
    %v37 = vrot.slane %v30, %v36
    %v39 = vmul.f32 %v24, %v37
    %v40 = vmul.f32 %v25, %v37
    %41 = vst [vmem:[#allocation5] sm:$0xff] %v39
    %42 = vst [vmem:[#allocation5 + $0x8] sm:$0xff] %v40
    // Predicated region
    $region14: #{tpu_custom_call.1} parent=1 // pred_check
      _
    $region15: #{tpu_custom_call.1} parent=1 // pred_check_branch
      %44 = sbr.rel (0) target = $region17
    $region16: #{tpu_custom_call.1} parent=1 // pred_region
      %s46 = ssub.s32 256, 256
      %47 = vsyncadd [#allocation4], %s46
      %s49 = sshll.u32 [#allocation5], 4
      %s50 = int_to_ptr.vmem [resolvable:$true] %s49
      %52 = dma.vmem_to_hbm [thread:$0]  %s50, 256, %s2, [#allocation4]
    $region17: #{tpu_custom_call.1} parent=1 // pred_fallthru
      _
    // Predicated region
    $region18: #{tpu_custom_call.1} parent=1 // pred_check
      _
    $region19: #{tpu_custom_call.1} parent=1 // pred_check_branch
      %54 = sbr.rel (0) target = $region21
    $region20: #{tpu_custom_call.1} parent=1 // pred_region
      %55 = dma.done [#allocation4], 256
    $region21: #{tpu_custom_call.1} parent=1 // pred_fallthru
      _
    %56 = vsyncpa [#allocation3], 1
    %57 = vsyncpa [#allocation4], 1

</llo_original>
